<compile_context>
chip_gen: v7x
topology: tpu7x:2x2x1
jax: 0.10.0
libtpu: 0.0.40
codegen_flags: <defaults>
</compile_context>

<pallas_src>
import math

import jax
import jax.numpy as jnp
from jax.experimental import pallas as pl
from jax.experimental.pallas import tpu as pltpu


def _build_pe(max_len: int, d_model: int) -> jnp.ndarray:
    """Deterministic positional-encoding table, identical to the PyTorch __init__.

    Built once at module-init time, kept in float32 (like the registered buffer);
    the forward path never re-casts or re-materializes it.
    """
    position = jnp.arange(0.0, max_len, dtype=jnp.float32)[:, None]            # (L, 1)
    div_term = jnp.exp(
        jnp.arange(0.0, d_model, 2, dtype=jnp.float32)
        * -(math.log(10000.0) / d_model)
    )                                                                           # (D/2,)
    angles = position * div_term                                                # (L, D/2)
    pe = jnp.zeros((max_len, d_model), dtype=jnp.float32)
    pe = pe.at[:, 0::2].set(jnp.sin(angles))
    pe = pe.at[:, 1::2].set(jnp.cos(angles))
    return pe[None, :, :]                                                       # (1, L, D)


def _pe_add_kernel(x_ref, pe_ref, o_ref):
    # Add in f32 (pe tile stays f32, as in PyTorch); cast only the final sum.
    o_ref[...] = (x_ref[...].astype(jnp.float32) + pe_ref[...]).astype(o_ref.dtype)


def _pick_lane_tile(n: int, itemsize_x: int, budget_bytes: int = 12 << 20) -> int:
    """Column-tile width (lanes) whose padded, double-buffered VMEM footprint fits.

    Per 128-lane column unit (rows padded to the 8-sublane tile):
      x block + out block : 8 * 128 * itemsize_x each, double-buffered
      pe block (f32)      : 8 * 128 * 4,               double-buffered
    """
    per_unit = 2 * 128 * 8 * (2 * itemsize_x + 4)
    units = max(1, budget_bytes // per_unit)
    tc = units * 128
    if n % 128 == 0:
        return min(tc, n)
    if n > 128:
        # Multiple-of-128 tile + cdiv grid: only the last block is partial
        # (masked store on the edge only) -- never a full-width odd block.
        return min(tc, (n // 128) * 128)
    # Tiny problem: a block equal to the full array dim also satisfies tiling rules.
    return n


def positional_encoding_forward(x: jnp.ndarray, pe: jnp.ndarray) -> jnp.ndarray:
    """x: (B, S, D); pe: (1, max_len, D) float32. Returns x + pe[:, :S] in x.dtype."""
    B, S, D = x.shape
    _, max_len, Dp = pe.shape
    assert Dp == D and S <= max_len
    N = S * D
    itemsize = jnp.dtype(x.dtype).itemsize

    # Contiguous reshapes: pure layout plumbing, no data movement, no cast.
    x2 = x.reshape(B, N)
    pe2 = pe.reshape(1, max_len * D)

    # Row tile: at most 8 (one sublane tile); cdiv grid handles any batch size.
    tb = 8 if B >= 8 else B
    tc = _pick_lane_tile(N, itemsize)
    n_b = pl.cdiv(B, tb)
    n_c = pl.cdiv(N, tc)

    cost = pl.CostEstimate(
        flops=B * N,
        transcendentals=0,
        bytes_accessed=2 * B * N * itemsize + N * jnp.dtype(pe.dtype).itemsize,
    )

    out2 = pl.pallas_call(
        _pe_add_kernel,
        out_shape=jax.ShapeDtypeStruct((B, N), x.dtype),
        # Batch is the fastest-varying grid axis -> the PE tile's block index is
        # constant across consecutive steps, so its re-DMA is elided.
        grid=(n_c, n_b),
        in_specs=[
            pl.BlockSpec((tb, tc), lambda c, b: (b, c)),   # x tile
            pl.BlockSpec((1, tc), lambda c, b: (0, c)),    # PE tile (first S*D cols)
        ],
        out_specs=pl.BlockSpec((tb, tc), lambda c, b: (b, c)),
        # In-place add on x's HBM buffer; x must be dead after this call
        # (guaranteed by donate_argnums below). Safe to drop if x has other users.
        input_output_aliases={0: 0},
        compiler_params=pltpu.CompilerParams(
            dimension_semantics=("parallel", "parallel"),  # megacore-shardable
            vmem_limit_bytes=32 * 1024 * 1024,             # headroom on every gen
        ),
        cost_estimate=cost,
    )(x2, pe2)

    return out2.reshape(B, S, D)


# Donate x at the jit boundary so the in-place alias is honored end-to-end.
positional_encoding_forward_jit = jax.jit(positional_encoding_forward, donate_argnums=0)


if __name__ == "__main__":
    max_len = 80

    # --- primary test: d_model=32, batch=2, seq=8 (lane-dense N = 256) ---------
    d_model, batch, seq = 32, 2, 8
    pe = _build_pe(max_len, d_model)
    key = jax.random.PRNGKey(0)
    x = jax.random.normal(key, (batch, seq, d_model), dtype=jnp.float32)
    ref = x + pe[:, :seq, :]                     # computed BEFORE the donated call
    out = jax.block_until_ready(positional_encoding_forward_jit(x, pe))
    assert out.shape == (batch, seq, d_model)
    assert jnp.allclose(out, ref, atol=1e-6), "f32 mismatch vs reference"

    # --- odd-width test: d_model=24 -> N=192 (exercises masked edge block) -----
    d_model2 = 24
    pe2t = _build_pe(max_len, d_model2)
    x2t = jax.random.normal(jax.random.PRNGKey(1), (batch, seq, d_model2),
                            dtype=jnp.float32)
    ref2 = x2t + pe2t[:, :seq, :]
    out2 = jax.block_until_ready(positional_encoding_forward_jit(x2t, pe2t))
    assert jnp.allclose(out2, ref2, atol=1e-6), "odd-N mismatch vs reference"

    # --- bf16 test: add computed in f32 in-kernel, cast only the final sum -----
    x3 = jax.random.normal(jax.random.PRNGKey(2), (batch, seq, d_model),
                           dtype=jnp.bfloat16)
    ref3 = (x3.astype(jnp.float32) + pe[:, :seq, :]).astype(jnp.bfloat16)
    out3 = jax.block_until_ready(positional_encoding_forward_jit(x3, pe))
    assert jnp.allclose(out3.astype(jnp.float32), ref3.astype(jnp.float32),
                        atol=1e-2), "bf16 mismatch vs reference"

    print("KERNEL_OK")
</pallas_src>

<mosaic_0001>
module attributes {stable_mosaic.version = 11 : i64} {
  func.func @_pe_add_kernel(%arg0: i32, %arg1: i32, %arg2: memref<2x256xf32, #tpu.memory_space<vmem>>, %arg3: memref<1x256xf32, #tpu.memory_space<vmem>>, %arg4: memref<2x256xf32, #tpu.memory_space<vmem>>) attributes {dimension_semantics = [#tpu.dimension_semantics<parallel>, #tpu.dimension_semantics<parallel>], iteration_bounds = array<i64: 1, 1>, scalar_prefetch = 0 : i64, scratch_operands = 0 : i64, tpu.core_type = #tpu.core_type<tc>, window_params = [{transform_indices = @transform_0, window_bounds = array<i64: 2, 256>}, {transform_indices = @transform_1, window_bounds = array<i64: 1, 256>}, {transform_indices = @transform_2, window_bounds = array<i64: 2, 256>}]} {
    %c0 = arith.constant 0 : index
    %c0_0 = arith.constant 0 : index
    %0 = vector.load %arg2[%c0, %c0_0] : memref<2x256xf32, #tpu.memory_space<vmem>>, vector<2x256xf32>
    %c0_1 = arith.constant 0 : index
    %c0_2 = arith.constant 0 : index
    %1 = vector.load %arg3[%c0_1, %c0_2] : memref<1x256xf32, #tpu.memory_space<vmem>>, vector<1x256xf32>
    %2 = vector.broadcast %1 : vector<1x256xf32> to vector<2x256xf32>
    %3 = arith.addf %0, %2 : vector<2x256xf32>
    %c0_3 = arith.constant 0 : index
    %c0_4 = arith.constant 0 : index
    %4 = vector.load %arg4[%c0_3, %c0_4] : memref<2x256xf32, #tpu.memory_space<vmem>>, vector<2x256xf32>
    tpu.vector_store %arg4[%c0_3, %c0_4], %3 {strides = array<i32>} : memref<2x256xf32, #tpu.memory_space<vmem>>, vector<2x256xf32>,
    return
  }
  func.func @transform_0(%arg0: i32, %arg1: i32) -> (i32, i32) {
    %c0_i32 = arith.constant 0 : i32
    return %arg1, %arg0 : i32, i32
  }
  func.func @transform_1(%arg0: i32, %arg1: i32) -> (i32, i32) {
    %c0_i32 = arith.constant 0 : i32
    %c0_i32_0 = arith.constant 0 : i32
    return %c0_i32, %arg0 : i32, i32
  }
  func.func @transform_2(%arg0: i32, %arg1: i32) -> (i32, i32) {
    %c0_i32 = arith.constant 0 : i32
    return %arg1, %arg0 : i32, i32
  }
}

</mosaic_0001>

<llo_original>
// kernel: positional_encoding_forward.1
$region0: #{positional_encoding_forward.1}
  #allocation0 [shape = 'u32[]', space=smem, size = 0x4, offset = 0x4, fixed_abs, tag = 'smem constant byte address 0x4 - core index']
  #allocation1 [shape = 'u32[144,128]{1,0:T(1,128)}', space=vmem, size = 0x12000, scoped, tag = 'internal scratch']
  %s0 = inlined_call_operand.vmem [shape: f32[2,256], index: 0, kind: input, shape index: {}, may-alias: {0,2}]
  %s1 = inlined_call_operand.vmem [shape: f32[1,2560], index: 1, kind: input, shape index: {}]
  %s2 = inlined_call_operand.vmem [shape: f32[2,256], index: 2, kind: output, shape index: {}, may-alias: {0,2}]
  %s3 = sld [smem:[#allocation0]]
  $region18: #{positional_encoding_forward.1} parent=0
    _
  %s5 = ssub.s32 1, %s3
  %s6 = scalar_select 0, %s5, %s3
  // Predicated region
  $region2: #{positional_encoding_forward.1} parent=0 // pred_check
    _
  $region3: #{positional_encoding_forward.1} parent=0 // pred_check_branch
    %8 = sbr.rel (0) target = $region5
  $region4: #{positional_encoding_forward.1} parent=0 // pred_region
    _
  $region5: #{positional_encoding_forward.1} parent=0 // pred_fallthru
    _
  // Predicated region
  $region6: #{positional_encoding_forward.1} parent=0 // pred_check
    _
  $region7: #{positional_encoding_forward.1} parent=0 // pred_check_branch
    %10 = sbr.rel (0) target = $region9
  $region8: #{positional_encoding_forward.1} parent=0 // pred_region
    _
  $region9: #{positional_encoding_forward.1} parent=0 // pred_fallthru
    _
  %v11 = vld [vmem:[%s0] sm:$0xf]
  %v12 = vld [vmem:[%s1] sm:$0x3]
  %v14 = vlaneseq
  %v15 = vshrl.u32 %v14, 7
  %v16 = vsub.s32 0, %v15
  %v17 = vrot.slane %v12, %v16
  %v18 = vlaneseq
  %v19 = vshrl.u32 %v18, 7
  %v20 = vsub.s32 1, %v19
  %v21 = vrot.slane %v12, %v20
  %v22 = vcombine.low %v17, %v21
  %v24 = vunpack.c.l.s4 1983009808
  %v25 = vunpack.c.0.s8 %v24
  %v26 = vlaneseq
  %v27 = vshrl.u32 %v26, 7
  %v28 = vsub.s32 %v25, %v27
  %v29 = vrot.slane %v22, %v28
  %v31 = vadd.f32 %v11, %v29
  %32 = vst [vmem:[%s2] sm:$0xf] %v31
  // Predicated region
  $region10: #{positional_encoding_forward.1} parent=0 // pred_check
    _
  $region11: #{positional_encoding_forward.1} parent=0 // pred_check_branch
    %34 = sbr.rel (0) target = $region13
  $region12: #{positional_encoding_forward.1} parent=0 // pred_region
    _
  $region13: #{positional_encoding_forward.1} parent=0 // pred_fallthru
    _
  // Predicated region
  $region14: #{positional_encoding_forward.1} parent=0 // pred_check
    _
  $region15: #{positional_encoding_forward.1} parent=0 // pred_check_branch
    %36 = sbr.rel (0) target = $region17
  $region16: #{positional_encoding_forward.1} parent=0 // pred_region
    _
  $region17: #{positional_encoding_forward.1} parent=0 // pred_fallthru
    _

</llo_original>
